<compile_context>
chip_gen: v6e
topology: v6e:2x2x1
jax: 0.10.0
libtpu: 0.0.40
codegen_flags: <defaults>
</compile_context>

<pallas_src>
import jax
import jax.numpy as jnp
from jax.experimental import pallas as pl
from jax.experimental.pallas import tpu as pltpu

# Default for gState.args.sigscale (runtime global in the reference code).
DEFAULT_SIGSCALE = 1.0

# Block sizing: double-buffered in+out is ~4x the block (32 MiB at an 8 MiB
# block) plus tiny weights, so a 48 MiB scoped-VMEM limit leaves ~16 MiB of
# headroom on v7x (64 MiB physical) and is trivially safe on v5e/v6e (128 MiB
# physical; the v5e scoped default is only 16 MiB, so the explicit override is
# required there).
_TARGET_BLOCK_BYTES = 8 * 1024 * 1024
_VMEM_LIMIT_BYTES = 48 * 1024 * 1024
_PIPELINE_VMEM_BUDGET = 40 * 1024 * 1024   # 4x block + weights must fit here


def _se_kernel(x_ref, w1t_ref, w2t_ref, sig_ref, o_ref):
    # x_ref:   [TB, C, HW]  tile of flattened activations (VMEM, native dtype)
    # w1t_ref: [C, Cr]      fc1 weight, pre-transposed (VMEM, constant block)
    # w2t_ref: [Cr, C]      fc2 weight, pre-transposed (VMEM, constant block)
    # sig_ref: [1]          runtime sigscale scalar (SMEM)
    x = x_ref[...]                                            # native dtype, no upcast copy
    hw = x.shape[2]

    # Squeeze: global average pool over spatial dims (dim=(2,3) in NCHW),
    # accumulated in f32 without materializing an f32 copy of the whole tile.
    pooled = jnp.sum(x, axis=2, dtype=jnp.float32) * (1.0 / hw)   # [TB, C]

    # Excite: batched over the TB rows of this tile (no N=1 matvecs).
    h = jnp.dot(pooled, w1t_ref[...],
                preferred_element_type=jnp.float32)           # [TB, Cr]
    h = jnp.maximum(h, 0.0)
    z = jnp.dot(h, w2t_ref[...],
                preferred_element_type=jnp.float32)           # [TB, C]
    gate = jax.nn.sigmoid(z) * sig_ref[0]                     # [TB, C] f32
    # NOTE(v7x): if the XLU cross-lane reduce ever shows on the critical path,
    # the pooling can be moved onto the idle MXU (dot with a ones[HW] vector).

    # Scale: per-(batch, channel) gate broadcast over all spatial positions,
    # multiplied in the native activation dtype.
    o_ref[...] = (x * gate.astype(x.dtype)[:, :, None]).astype(o_ref.dtype)


def _pick_batch_tile(batch, slab_bytes):
    """Batch tile from the byte target only (no divisor / >=2-step rules).

    Blocks are rebalanced so a ragged tail block is never tiny:
    cdiv(B, cdiv(B, cap)) <= cap, so the byte target is still respected."""
    cap = max(1, _TARGET_BLOCK_BYTES // max(slab_bytes, 1))
    tb = min(batch, cap)
    n_blocks = pl.cdiv(batch, tb)
    return pl.cdiv(batch, n_blocks)


def se_module_ref(x, w1, w2, sigscale=DEFAULT_SIGSCALE):
    """Pure-JAX reference matching the PyTorch forward."""
    pooled = jnp.mean(x, axis=(2, 3), keepdims=True)          # [B, C, 1, 1]
    h = jnp.einsum('oc,bcij->boij', w1, pooled)               # fc1 (1x1 conv)
    h = jnp.maximum(h, 0.0)
    z = jnp.einsum('oc,bcij->boij', w2, h)                    # fc2 (1x1 conv)
    gate = jax.nn.sigmoid(z) * sigscale
    return x * gate


def se_module(x, w1, w2, sigscale=DEFAULT_SIGSCALE):
    """x: [B, C, H, W]; w1: [C//r, C] (fc1 1x1-conv weight, no bias);
    w2: [C, C//r]; sigscale: python/float scalar -> [B, C, H, W]."""
    B, C, H, W = x.shape
    Cr = w1.shape[0]
    HW = H * W

    slab_bytes = C * HW * x.dtype.itemsize
    weight_bytes = 2 * C * Cr * 4

    # fc1 mixes ALL channels, so neither C nor HW can be tiled in a single pass
    # over x.  If even a single [1, C, HW] slab (x4 for double-buffered in+out)
    # blows the VMEM budget, a two-phase kernel (pool pass + scale pass) is
    # required; until then, fall back to the pure-JAX path for such shapes.
    # TODO(synk): two-phase (pool + scale) Pallas kernel for per-sample slabs
    # that exceed the VMEM budget.
    if 4 * slab_bytes + 2 * weight_bytes > _PIPELINE_VMEM_BUDGET:
        return se_module_ref(x, w1, w2, sigscale)

    x_flat = x.reshape(B, C, HW)

    # Pre-transpose the tiny weights once (outside the kernel) so the kernel
    # issues plain row-major matmuls with no in-kernel transposes.
    w1_t = jnp.transpose(w1).astype(jnp.float32)              # [C, Cr]
    w2_t = jnp.transpose(w2).astype(jnp.float32)              # [Cr, C]
    sig = jnp.asarray([sigscale], dtype=jnp.float32)          # SMEM scalar

    TB = _pick_batch_tile(B, slab_bytes)
    grid = (pl.cdiv(B, TB),)                                  # ragged tail OK

    cost = pl.CostEstimate(
        flops=int(2 * B * C * HW + 4 * B * C * Cr),
        transcendentals=int(B * C),
        bytes_accessed=int(2 * B * C * HW * x.dtype.itemsize + weight_bytes),
    )

    out_flat = pl.pallas_call(
        _se_kernel,
        out_shape=jax.ShapeDtypeStruct((B, C, HW), x.dtype),
        grid_spec=pltpu.PrefetchScalarGridSpec(
            num_scalar_prefetch=0,
            grid=grid,
            in_specs=[
                pl.BlockSpec((TB, C, HW), lambda b: (b, 0, 0)),
                pl.BlockSpec((C, Cr), lambda b: (0, 0)),   # constant -> loaded once
                pl.BlockSpec((Cr, C), lambda b: (0, 0)),   # constant -> loaded once
                pl.BlockSpec(memory_space=pltpu.MemorySpace.SMEM),
            ],
            out_specs=pl.BlockSpec((TB, C, HW), lambda b: (b, 0, 0)),
        ),
        compiler_params=pltpu.CompilerParams(
            dimension_semantics=("parallel",),
            vmem_limit_bytes=_VMEM_LIMIT_BYTES,
        ),
        cost_estimate=cost,
    )(x_flat, w1_t, w2_t, sig)

    return out_flat.reshape(B, C, H, W)


if __name__ == "__main__":
    # Small shapes consistent with the module (channels // reduction >= 1).
    B, C, H, W = 2, 64, 8, 8
    reduction = 16
    Cr = C // reduction  # 4
    sigscale = 1.0

    key = jax.random.PRNGKey(0)
    kx, k1, k2 = jax.random.split(key, 3)

    x = jax.random.normal(kx, (B, C, H, W), dtype=jnp.float32)
    # Deterministic synthetic weights (Conv2d kernel_size=1, bias=False).
    w1 = jax.random.normal(k1, (Cr, C), dtype=jnp.float32) * 0.1   # fc1.weight[:, :, 0, 0]
    w2 = jax.random.normal(k2, (C, Cr), dtype=jnp.float32) * 0.1   # fc2.weight[:, :, 0, 0]

    out = se_module(x, w1, w2, sigscale)
    out = jax.block_until_ready(out)

    ref = se_module_ref(x, w1, w2, sigscale)
    assert out.shape == x.shape and out.dtype == x.dtype
    assert jnp.allclose(out, ref, atol=1e-5, rtol=1e-5), "mismatch vs reference"

    print("KERNEL_OK")
</pallas_src>

<mosaic_0001>
module attributes {stable_mosaic.version = 11 : i64} {
  func.func @_se_kernel(%arg0: i32, %arg1: memref<2x64x64xf32, #tpu.memory_space<vmem>>, %arg2: memref<64x4xf32, #tpu.memory_space<vmem>>, %arg3: memref<4x64xf32, #tpu.memory_space<vmem>>, %arg4: memref<1xf32, #tpu.memory_space<smem>>, %arg5: memref<2x64x64xf32, #tpu.memory_space<vmem>>) attributes {dimension_semantics = [#tpu.dimension_semantics<parallel>], iteration_bounds = array<i64: 1>, scalar_prefetch = 0 : i64, scratch_operands = 0 : i64, tpu.core_type = #tpu.core_type<tc>, window_params = [{transform_indices = @transform_0, window_bounds = array<i64: 2, 64, 64>}, {pipeline_mode = #tpu.pipeline_mode<synchronous>, transform_indices = @transform_1, window_bounds = array<i64: 64, 4>}, {pipeline_mode = #tpu.pipeline_mode<synchronous>, transform_indices = @transform_2, window_bounds = array<i64: 4, 64>}, {transform_indices = @transform_3, window_bounds = array<i64: 1>}, {transform_indices = @transform_4, window_bounds = array<i64: 2, 64, 64>}]} {
    %c0 = arith.constant 0 : index
    %c0_0 = arith.constant 0 : index
    %c0_1 = arith.constant 0 : index
    %0 = vector.load %arg1[%c0, %c0_0, %c0_1] : memref<2x64x64xf32, #tpu.memory_space<vmem>>, vector<2x64x64xf32>
    %cst = arith.constant dense<0.000000e+00> : vector<2x64xf32>
    %1 = vector.multi_reduction <add>, %0, %cst [2] : vector<2x64x64xf32> to vector<2x64xf32>
    %cst_2 = arith.constant 1.562500e-02 : f32
    %2 = vector.broadcast %cst_2 : f32 to vector<2x64xf32>
    %3 = arith.mulf %1, %2 : vector<2x64xf32>
    %c0_3 = arith.constant 0 : index
    %c0_4 = arith.constant 0 : index
    %4 = vector.load %arg2[%c0_3, %c0_4] : memref<64x4xf32, #tpu.memory_space<vmem>>, vector<64x4xf32>
    %cst_5 = arith.constant dense<0.000000e+00> : vector<2x4xf32>
    %5 = tpu.matmul %3, %4, %cst_5 {dimension_numbers = #tpu.dot_dimension_numbers<[1], [0], [0], [1], [0, 0, 1, 1], [], []>} : vector<2x64xf32>, vector<64x4xf32>, vector<2x4xf32> -> vector<2x4xf32>
    %cst_6 = arith.constant 0.000000e+00 : f32
    %6 = vector.broadcast %cst_6 : f32 to vector<2x4xf32>
    %7 = arith.maximumf %5, %6 : vector<2x4xf32>
    %c0_7 = arith.constant 0 : index
    %c0_8 = arith.constant 0 : index
    %8 = vector.load %arg3[%c0_7, %c0_8] : memref<4x64xf32, #tpu.memory_space<vmem>>, vector<4x64xf32>
    %cst_9 = arith.constant dense<0.000000e+00> : vector<2x64xf32>
    %9 = tpu.matmul %7, %8, %cst_9 {dimension_numbers = #tpu.dot_dimension_numbers<[1], [0], [0], [1], [0, 0, 1, 1], [], []>} : vector<2x4xf32>, vector<4x64xf32>, vector<2x64xf32> -> vector<2x64xf32>
    %10 = arith.negf %9 : vector<2x64xf32>
    %11 = math.exp %10 : vector<2x64xf32>
    %cst_10 = arith.constant 1.000000e+00 : f32
    %12 = vector.broadcast %cst_10 : f32 to vector<2x64xf32>
    %13 = arith.addf %12, %11 : vector<2x64xf32>
    %14 = arith.divf %12, %13 : vector<2x64xf32>
    %c0_11 = arith.constant 0 : index
    %15 = memref.load %arg4[%c0_11] : memref<1xf32, #tpu.memory_space<smem>>
    %16 = vector.broadcast %15 : f32 to vector<2x64xf32>
    %17 = arith.mulf %14, %16 : vector<2x64xf32>
    %18 = vector.shape_cast %17 : vector<2x64xf32> to vector<2x64x1xf32>
    %19 = vector.broadcast %18 : vector<2x64x1xf32> to vector<2x64x64xf32>
    %20 = arith.mulf %0, %19 : vector<2x64x64xf32>
    %c0_12 = arith.constant 0 : index
    %c0_13 = arith.constant 0 : index
    %c0_14 = arith.constant 0 : index
    %21 = vector.load %arg5[%c0_12, %c0_13, %c0_14] : memref<2x64x64xf32, #tpu.memory_space<vmem>>, vector<2x64x64xf32>
    tpu.vector_store %arg5[%c0_12, %c0_13, %c0_14], %20 {strides = array<i32>} : memref<2x64x64xf32, #tpu.memory_space<vmem>>, vector<2x64x64xf32>,
    return
  }
  func.func @transform_0(%arg0: i32) -> (i32, i32, i32) {
    %c0_i32 = arith.constant 0 : i32
    %c0_i32_0 = arith.constant 0 : i32
    %c0_i32_1 = arith.constant 0 : i32
    return %arg0, %c0_i32, %c0_i32_0 : i32, i32, i32
  }
  func.func @transform_1(%arg0: i32) -> (i32, i32) {
    %c0_i32 = arith.constant 0 : i32
    %c0_i32_0 = arith.constant 0 : i32
    %c0_i32_1 = arith.constant 0 : i32
    return %c0_i32, %c0_i32_0 : i32, i32
  }
  func.func @transform_2(%arg0: i32) -> (i32, i32) {
    %c0_i32 = arith.constant 0 : i32
    %c0_i32_0 = arith.constant 0 : i32
    %c0_i32_1 = arith.constant 0 : i32
    return %c0_i32, %c0_i32_0 : i32, i32
  }
  func.func @transform_3(%arg0: i32) -> i32 {
    %c0_i32 = arith.constant 0 : i32
    %c0_i32_0 = arith.constant 0 : i32
    return %c0_i32 : i32
  }
  func.func @transform_4(%arg0: i32) -> (i32, i32, i32) {
    %c0_i32 = arith.constant 0 : i32
    %c0_i32_0 = arith.constant 0 : i32
    %c0_i32_1 = arith.constant 0 : i32
    return %arg0, %c0_i32, %c0_i32_0 : i32, i32, i32
  }
}

</mosaic_0001>

<llo_original>
// kernel: tpu_custom_call.1
$region0: #{tpu_custom_call.1}
  #allocation0 [shape = 'u32[]', space=smem, size = 0x4, offset = 0x4, fixed_abs, tag = 'smem constant byte address 0x4 - core index']
  #allocation1 [shape = 'u32[144,128]{1,0:T(1,128)}', space=vmem, size = 0x12000, scoped, tag = 'internal scratch']
  #allocation2 [shape = 'f32[1]{0:T(128)S(6)}', space=smem, size = 0x200, scoped, tag = 'scoped memory for tpu_custom_call.1']
  %s0 = inlined_call_operand.hbm [shape: f32[2,64,64], index: 0, kind: input, shape index: {}]
  %s1 = inlined_call_operand.vmem [shape: f32[64,4], index: 1, kind: input, shape index: {}]
  %s2 = inlined_call_operand.vmem [shape: f32[4,64], index: 2, kind: input, shape index: {}]
  %s3 = inlined_call_operand.<no memory space> [shape: f32[1], index: 3, kind: input, shape index: {}]
  %s4 = inlined_call_operand.hbm [shape: f32[2,64,64], index: 4, kind: output, shape index: {}]
  %s5 = sld [smem:[#allocation0]]
  $region30: #{tpu_custom_call.1} parent=0
    _
  %s7 = ssub.s32 1, %s5
  %s8 = scalar_select 0, %s7, %s5
  %9 = sst [smem:[#allocation2]] %s3
  $region1: #{tpu_custom_call.1} parent=0
    #allocation3 [shape = 'u8[65536]{0}', space=vmem, size = 0x10000, scoped, tag = 'input window, operand 0, single buffered']
    #allocation4 [shape = 's32[1]{0}', space=sflag, size = 0x4, scoped, tag = 'scoped memory for tpu_custom_call.1']
    #allocation5 [shape = 's32[1]{0}', space=sflag, size = 0x4, scoped, tag = 'scoped memory for tpu_custom_call.1']
    #allocation6 [shape = 'u8[65536]{0}', space=vmem, size = 0x10000, scoped, tag = 'output window, operand 0, single buffered']
    %10 = vsyncpa [#allocation4], 0
    %11 = vsyncpa [#allocation5], 0
    // Predicated region
    $region2: #{tpu_custom_call.1} parent=1 // pred_check
      _
    $region3: #{tpu_custom_call.1} parent=1 // pred_check_branch
      %13 = sbr.rel (0) target = $region5
    $region4: #{tpu_custom_call.1} parent=1 // pred_region
      %s15 = ssub.s32 2048, 2048
      %16 = vsyncadd [#allocation4], %s15
      %s17 = sshll.u32 [#allocation3], 4
      %s18 = int_to_ptr.vmem [resolvable:$true] %s17
      %23 = dma.hbm_to_vmem [thread:$0]  %s0, 2048, %s18, [#allocation4], 128, 128, 8
    $region5: #{tpu_custom_call.1} parent=1 // pred_fallthru
      _
    // Predicated region
    $region6: #{tpu_custom_call.1} parent=1 // pred_check
      _
    $region7: #{tpu_custom_call.1} parent=1 // pred_check_branch
      %25 = sbr.rel (0) target = $region9
    $region8: #{tpu_custom_call.1} parent=1 // pred_region
      _
    $region9: #{tpu_custom_call.1} parent=1 // pred_fallthru
      _
    // Predicated region
    $region10: #{tpu_custom_call.1} parent=1 // pred_check
      _
    $region11: #{tpu_custom_call.1} parent=1 // pred_check_branch
      %27 = sbr.rel (0) target = $region13
    $region12: #{tpu_custom_call.1} parent=1 // pred_region
      _
    $region13: #{tpu_custom_call.1} parent=1 // pred_fallthru
      _
    // Predicated region
    $region14: #{tpu_custom_call.1} parent=1 // pred_check
      _
    $region15: #{tpu_custom_call.1} parent=1 // pred_check_branch
      %29 = sbr.rel (0) target = $region17
    $region16: #{tpu_custom_call.1} parent=1 // pred_region
      _
    $region17: #{tpu_custom_call.1} parent=1 // pred_fallthru
      _
    // Predicated region
    $region18: #{tpu_custom_call.1} parent=1 // pred_check
      _
    $region19: #{tpu_custom_call.1} parent=1 // pred_check_branch
      %31 = sbr.rel (0) target = $region21
    $region20: #{tpu_custom_call.1} parent=1 // pred_region
      %32 = dma.done [#allocation4], 2048
    $region21: #{tpu_custom_call.1} parent=1 // pred_fallthru
      _
    %v33 = vld [vmem:[#allocation3] sm:$0xff]
    %v34 = vld [vmem:[#allocation3 + $0x8] sm:$0xff]
    %v35 = vld [vmem:[#allocation3 + $0x10] sm:$0xff]
    %v36 = vld [vmem:[#allocation3 + $0x18] sm:$0xff]
    %v37 = vld [vmem:[#allocation3 + $0x20] sm:$0xff]
    %v38 = vld [vmem:[#allocation3 + $0x28] sm:$0xff]
    %v39 = vld [vmem:[#allocation3 + $0x30] sm:$0xff]
    %v40 = vld [vmem:[#allocation3 + $0x38] sm:$0xff]
    %v41 = vld [vmem:[#allocation3 + $0x40] sm:$0xff]
    %v42 = vld [vmem:[#allocation3 + $0x48] sm:$0xff]
    %v43 = vld [vmem:[#allocation3 + $0x50] sm:$0xff]
    %v44 = vld [vmem:[#allocation3 + $0x58] sm:$0xff]
    %v45 = vld [vmem:[#allocation3 + $0x60] sm:$0xff]
    %v46 = vld [vmem:[#allocation3 + $0x68] sm:$0xff]
    %v47 = vld [vmem:[#allocation3 + $0x70] sm:$0xff]
    %v48 = vld [vmem:[#allocation3 + $0x78] sm:$0xff]
    %vm49 = vcmask 523264
    %v50 = vsel %vm49, %v33, 0.0
    %51 = vadd.xlane.f32.xlu0 %v50
    %v52 = vpop.xlane.xlu0 %51
    %v53 = vsel %vm49, %v34, 0.0
    %54 = vadd.xlane.f32.xlu0 %v53
    %v55 = vpop.xlane.xlu0 %54
    %v56 = vsel %vm49, %v35, 0.0
    %57 = vadd.xlane.f32.xlu0 %v56
    %v58 = vpop.xlane.xlu0 %57
    %v59 = vsel %vm49, %v36, 0.0
    %60 = vadd.xlane.f32.xlu0 %v59
    %v61 = vpop.xlane.xlu0 %60
    %v62 = vsel %vm49, %v37, 0.0
    %63 = vadd.xlane.f32.xlu0 %v62
    %v64 = vpop.xlane.xlu0 %63
    %v65 = vsel %vm49, %v38, 0.0
    %66 = vadd.xlane.f32.xlu0 %v65
    %v67 = vpop.xlane.xlu0 %66
    %v68 = vsel %vm49, %v39, 0.0
    %69 = vadd.xlane.f32.xlu0 %v68
    %v70 = vpop.xlane.xlu0 %69
    %v71 = vsel %vm49, %v40, 0.0
    %72 = vadd.xlane.f32.xlu0 %v71
    %v73 = vpop.xlane.xlu0 %72
    %v74 = vsel %vm49, %v41, 0.0
    %75 = vadd.xlane.f32.xlu0 %v74
    %v76 = vpop.xlane.xlu0 %75
    %v77 = vsel %vm49, %v42, 0.0
    %78 = vadd.xlane.f32.xlu0 %v77
    %v79 = vpop.xlane.xlu0 %78
    %v80 = vsel %vm49, %v43, 0.0
    %81 = vadd.xlane.f32.xlu0 %v80
    %v82 = vpop.xlane.xlu0 %81
    %v83 = vsel %vm49, %v44, 0.0
    %84 = vadd.xlane.f32.xlu0 %v83
    %v85 = vpop.xlane.xlu0 %84
    %v86 = vsel %vm49, %v45, 0.0
    %87 = vadd.xlane.f32.xlu0 %v86
    %v88 = vpop.xlane.xlu0 %87
    %v89 = vsel %vm49, %v46, 0.0
    %90 = vadd.xlane.f32.xlu0 %v89
    %v91 = vpop.xlane.xlu0 %90
    %v92 = vsel %vm49, %v47, 0.0
    %93 = vadd.xlane.f32.xlu0 %v92
    %v94 = vpop.xlane.xlu0 %93
    %v95 = vsel %vm49, %v48, 0.0
    %96 = vadd.xlane.f32.xlu0 %v95
    %v97 = vpop.xlane.xlu0 %96
    %v98 = vmul.f32 %v52, 0.015625
    %v99 = vmul.f32 %v55, 0.015625
    %v100 = vmul.f32 %v58, 0.015625
    %v101 = vmul.f32 %v61, 0.015625
    %v102 = vmul.f32 %v64, 0.015625
    %v103 = vmul.f32 %v67, 0.015625
    %v104 = vmul.f32 %v70, 0.015625
    %v105 = vmul.f32 %v73, 0.015625
    %v106 = vmul.f32 %v76, 0.015625
    %v107 = vmul.f32 %v79, 0.015625
    %v108 = vmul.f32 %v82, 0.015625
    %v109 = vmul.f32 %v85, 0.015625
    %v110 = vmul.f32 %v88, 0.015625
    %v111 = vmul.f32 %v91, 0.015625
    %v112 = vmul.f32 %v94, 0.015625
    %v113 = vmul.f32 %v97, 0.015625
    %v114 = vld [vmem:[%s1] sm:$0xff]
    %v115 = vld [vmem:[%s1 + $0x8] sm:$0xff]
    %v116 = vld [vmem:[%s1 + $0x10] sm:$0xff]
    %v117 = vld [vmem:[%s1 + $0x18] sm:$0xff]
    %v118 = vld [vmem:[%s1 + $0x20] sm:$0xff]
    %v119 = vld [vmem:[%s1 + $0x28] sm:$0xff]
    %v120 = vld [vmem:[%s1 + $0x30] sm:$0xff]
    %v121 = vld [vmem:[%s1 + $0x38] sm:$0xff]
    %v138 = vlaneseq
    %v139 = vand.u32 %v138, 127
    %v140 = vlaneseq
    %v141 = vshrl.u32 %v140, 7
    %v142 = vsub.s32 %v139, %v141
    %v143 = vrot.slane %v98, %v142
    %v144 = vadd.s32 %v139, 4294967288
    %v145 = vlaneseq
    %v146 = vshrl.u32 %v145, 7
    %v147 = vsub.s32 %v144, %v146
    %v148 = vrot.slane %v99, %v147
    %vm149 = vcmask 130112
    %v150 = vsel %vm149, %v148, %v143
    %v151 = vadd.s32 %v139, 4294967280
    %v152 = vlaneseq
    %v153 = vshrl.u32 %v152, 7
    %v154 = vsub.s32 %v151, %v153
    %v155 = vrot.slane %v100, %v154
    %vm156 = vcmask 195712
    %v157 = vsel %vm156, %v155, %v150
    %v158 = vadd.s32 %v139, 4294967272
    %v159 = vlaneseq
    %v160 = vshrl.u32 %v159, 7
    %v161 = vsub.s32 %v158, %v160
    %v162 = vrot.slane %v101, %v161
    %vm163 = vcmask 261312
    %v164 = vsel %vm163, %v162, %v157
    %v165 = vadd.s32 %v139, 4294967264
    %v166 = vlaneseq
    %v167 = vshrl.u32 %v166, 7
    %v168 = vsub.s32 %v165, %v167
    %v169 = vrot.slane %v102, %v168
    %vm170 = vcmask 326912
    %v171 = vsel %vm170, %v169, %v164
    %v172 = vadd.s32 %v139, 4294967256
    %v173 = vlaneseq
    %v174 = vshrl.u32 %v173, 7
    %v175 = vsub.s32 %v172, %v174
    %v176 = vrot.slane %v103, %v175
    %vm177 = vcmask 392512
    %v178 = vsel %vm177, %v176, %v171
    %v179 = vadd.s32 %v139, 4294967248
    %v180 = vlaneseq
    %v181 = vshrl.u32 %v180, 7
    %v182 = vsub.s32 %v179, %v181
    %v183 = vrot.slane %v104, %v182
    %vm184 = vcmask 458112
    %v185 = vsel %vm184, %v183, %v178
    %v186 = vadd.s32 %v139, 4294967240
    %v187 = vlaneseq
    %v188 = vshrl.u32 %v187, 7
    %v189 = vsub.s32 %v186, %v188
    %v190 = vrot.slane %v105, %v189
    %vm191 = vcmask 523712
    %v192 = vsel %vm191, %v190, %v185
    %v193 = vlaneseq
    %v194 = vshrl.u32 %v193, 7
    %v195 = vsub.s32 %v139, %v194
    %v196 = vrot.slane %v106, %v195
    %v197 = vlaneseq
    %v198 = vshrl.u32 %v197, 7
    %v199 = vsub.s32 %v144, %v198
    %v200 = vrot.slane %v107, %v199
    %v201 = vsel %vm149, %v200, %v196
    %v202 = vlaneseq
    %v203 = vshrl.u32 %v202, 7
    %v204 = vsub.s32 %v151, %v203
    %v205 = vrot.slane %v108, %v204
    %v206 = vsel %vm156, %v205, %v201
    %v207 = vlaneseq
    %v208 = vshrl.u32 %v207, 7
    %v209 = vsub.s32 %v158, %v208
    %v210 = vrot.slane %v109, %v209
    %v211 = vsel %vm163, %v210, %v206
    %v212 = vlaneseq
    %v213 = vshrl.u32 %v212, 7
    %v214 = vsub.s32 %v165, %v213
    %v215 = vrot.slane %v110, %v214
    %v216 = vsel %vm170, %v215, %v211
    %v217 = vlaneseq
    %v218 = vshrl.u32 %v217, 7
    %v219 = vsub.s32 %v172, %v218
    %v220 = vrot.slane %v111, %v219
    %v221 = vsel %vm177, %v220, %v216
    %v222 = vlaneseq
    %v223 = vshrl.u32 %v222, 7
    %v224 = vsub.s32 %v179, %v223
    %v225 = vrot.slane %v112, %v224
    %v226 = vsel %vm184, %v225, %v221
    %v227 = vlaneseq
    %v228 = vshrl.u32 %v227, 7
    %v229 = vsub.s32 %v186, %v228
    %v230 = vrot.slane %v113, %v229
    %v231 = vsel %vm191, %v230, %v226
    %vm232 = vcmask 1041409
    %v233 = vsel %vm232, %v231, %v192
    %v234 = vsel %vm49, %v233, 0
    %236 = vmatprep.subr.mxu0 0.0
    %237 = vmatpush1.msra.mxu0 0.0
    %238 = vmatprep.subr.mxu0 0.0
    %239 = vmatpush1.msra.mxu0 0.0
    %240 = vmatprep.subr.mxu0 0.0
    %241 = vmatpush1.msra.mxu0 0.0
    %242 = vmatprep.subr.mxu0 0.0
    %243 = vmatpush1.msra.mxu0 0.0
    %244 = vmatprep.subr.mxu0 0.0
    %245 = vmatpush1.msra.mxu0 0.0
    %246 = vmatprep.subr.mxu0 0.0
    %247 = vmatpush1.msra.mxu0 0.0
    %248 = vmatprep.subr.mxu0 0.0
    %249 = vmatpush1.msra.mxu0 0.0
    %250 = vmatprep.subr.mxu0 0.0
    %251 = vmatpush1.msra.mxu0 0.0
    %252 = vmatprep.subr.mxu0 0.0
    %253 = vmatpush1.msra.mxu0 %v121
    %254 = vmatprep.subr.mxu0 0.0
    %255 = vmatpush1.msra.mxu0 %v120
    %256 = vmatprep.subr.mxu0 0.0
    %257 = vmatpush1.msra.mxu0 %v119
    %258 = vmatprep.subr.mxu0 0.0
    %259 = vmatpush1.msra.mxu0 %v118
    %260 = vmatprep.subr.mxu0 0.0
    %261 = vmatpush1.msra.mxu0 %v117
    %262 = vmatprep.subr.mxu0 0.0
    %263 = vmatpush1.msra.mxu0 %v116
    %264 = vmatprep.subr.mxu0 0.0
    %265 = vmatpush1.msra.mxu0 %v115
    %266 = vmatprep.subr.mxu0 0.0
    %267 = vmatpush1.msra.mxu0 %v114
    %268 = vmatprep.subr.mxu0 0.0
    %269 = vmatpush2.msra.mxu0 0.0
    %270 = vmatprep.subr.mxu0 0.0
    %271 = vmatpush2.msra.mxu0 0.0
    %272 = vmatprep.subr.mxu0 0.0
    %273 = vmatpush2.msra.mxu0 0.0
    %274 = vmatprep.subr.mxu0 0.0
    %275 = vmatpush2.msra.mxu0 0.0
    %276 = vmatprep.subr.mxu0 0.0
    %277 = vmatpush2.msra.mxu0 0.0
    %278 = vmatprep.subr.mxu0 0.0
    %279 = vmatpush2.msra.mxu0 0.0
    %280 = vmatprep.subr.mxu0 0.0
    %281 = vmatpush2.msra.mxu0 0.0
    %282 = vmatprep.subr.mxu0 0.0
    %283 = vmatpush2.msra.mxu0 0.0
    %284 = vmatprep.subr.mxu0 0.0
    %285 = vmatpush2.msra.mxu0 0.0
    %286 = vmatprep.subr.mxu0 0.0
    %287 = vmatpush2.msra.mxu0 0.0
    %288 = vmatprep.subr.mxu0 0.0
    %289 = vmatpush2.msra.mxu0 0.0
    %290 = vmatprep.subr.mxu0 0.0
    %291 = vmatpush2.msra.mxu0 0.0
    %292 = vmatprep.subr.mxu0 0.0
    %293 = vmatpush2.msra.mxu0 0.0
    %294 = vmatprep.subr.mxu0 0.0
    %295 = vmatpush2.msra.mxu0 0.0
    %296 = vmatprep.subr.mxu0 0.0
    %297 = vmatpush2.msra.mxu0 0.0
    %298 = vmatprep.subr.mxu0 0.0
    %299 = vmatpush2.msra.mxu0 0.0
    %300 = vmatprep.mubr.f32.mxu0 0.0
    %301 = vmatmul.mubr.f32.gmra.mxu0 %v234
    %v302 = vpop.f32.mrf.mxu0
    %v303 = vadd.f32 0.0, %v302
    %v304 = vpop.f32.mrf.mxu0
    %305 = vdwg.mxu0
    %v306 = vmax.f32 %v303, 0.0
    %v307 = vld [vmem:[%s2] sm:$0xf]
    %vm308 = vcmask 31744
    %v310 = vsel %vm308, %v306, 0
    %vm312 = vcmask 1043456
    %v314 = vsel %vm312, %v307, 0
    %316 = vmatprep.subr.mxu0 0.0
    %317 = vmatpush1.msra.mxu0 0.0
    %318 = vmatprep.subr.mxu0 0.0
    %319 = vmatpush1.msra.mxu0 0.0
    %320 = vmatprep.subr.mxu0 0.0
    %321 = vmatpush1.msra.mxu0 0.0
    %322 = vmatprep.subr.mxu0 0.0
    %323 = vmatpush1.msra.mxu0 0.0
    %324 = vmatprep.subr.mxu0 0.0
    %325 = vmatpush1.msra.mxu0 0.0
    %326 = vmatprep.subr.mxu0 0.0
    %327 = vmatpush1.msra.mxu0 0.0
    %328 = vmatprep.subr.mxu0 0.0
    %329 = vmatpush1.msra.mxu0 0.0
    %330 = vmatprep.subr.mxu0 0.0
    %331 = vmatpush1.msra.mxu0 0.0
    %332 = vmatprep.subr.mxu0 0.0
    %333 = vmatpush1.msra.mxu0 0.0
    %334 = vmatprep.subr.mxu0 0.0
    %335 = vmatpush1.msra.mxu0 0.0
    %336 = vmatprep.subr.mxu0 0.0
    %337 = vmatpush1.msra.mxu0 0.0
    %338 = vmatprep.subr.mxu0 0.0
    %339 = vmatpush1.msra.mxu0 0.0
    %340 = vmatprep.subr.mxu0 0.0
    %341 = vmatpush1.msra.mxu0 0.0
    %342 = vmatprep.subr.mxu0 0.0
    %343 = vmatpush1.msra.mxu0 0.0
    %344 = vmatprep.subr.mxu0 0.0
    %345 = vmatpush1.msra.mxu0 0.0
    %346 = vmatprep.subr.mxu0 0.0
    %347 = vmatpush1.msra.mxu0 %v314
    %348 = vmatprep.subr.mxu0 0.0
    %349 = vmatpush2.msra.mxu0 0.0
    %350 = vmatprep.subr.mxu0 0.0
    %351 = vmatpush2.msra.mxu0 0.0
    %352 = vmatprep.subr.mxu0 0.0
    %353 = vmatpush2.msra.mxu0 0.0
    %354 = vmatprep.subr.mxu0 0.0
    %355 = vmatpush2.msra.mxu0 0.0
    %356 = vmatprep.subr.mxu0 0.0
    %357 = vmatpush2.msra.mxu0 0.0
    %358 = vmatprep.subr.mxu0 0.0
    %359 = vmatpush2.msra.mxu0 0.0
    %360 = vmatprep.subr.mxu0 0.0
    %361 = vmatpush2.msra.mxu0 0.0
    %362 = vmatprep.subr.mxu0 0.0
    %363 = vmatpush2.msra.mxu0 0.0
    %364 = vmatprep.subr.mxu0 0.0
    %365 = vmatpush2.msra.mxu0 0.0
    %366 = vmatprep.subr.mxu0 0.0
    %367 = vmatpush2.msra.mxu0 0.0
    %368 = vmatprep.subr.mxu0 0.0
    %369 = vmatpush2.msra.mxu0 0.0
    %370 = vmatprep.subr.mxu0 0.0
    %371 = vmatpush2.msra.mxu0 0.0
    %372 = vmatprep.subr.mxu0 0.0
    %373 = vmatpush2.msra.mxu0 0.0
    %374 = vmatprep.subr.mxu0 0.0
    %375 = vmatpush2.msra.mxu0 0.0
    %376 = vmatprep.subr.mxu0 0.0
    %377 = vmatpush2.msra.mxu0 0.0
    %378 = vmatprep.subr.mxu0 0.0
    %379 = vmatpush2.msra.mxu0 0.0
    %380 = vmatprep.mubr.f32.mxu0 0.0
    %381 = vmatmul.mubr.f32.gmra.mxu0 %v310
    %v382 = vpop.f32.mrf.mxu0
    %v383 = vadd.f32 0.0, %v382
    %v384 = vpop.f32.mrf.mxu0
    %385 = vdwg.mxu0
    %v386 = vxor.u32 %v383, 2147483648
    %v387 = vmul.f32 %v386, 1.442695
    %v388 = vpow.pop %v387
    %v389 = vadd.f32 %v388, 1.0
    %v390 = vrcp.pop %v389
    %v391 = vmul.f32 1.0, %v390
    %s392 = sld [smem:[#allocation2]]
    %v393 = vstv %s392
    %v394 = vmul.f32 %v391, %v393
    %v395 = vlaneseq
    %v396 = vshrl.u32 %v395, 7
    %v397 = vsub.s32 0, %v396
    %v398 = vrot.slane %v394, %v397
    %400 = vbcast.lane.b32.xlu0 %v398, 256
    %v401 = vpop.permute.xlu0 %400
    %s403 = sor.u32 256, 8
    %404 = vbcast.lane.b32.xlu0 %v398, %s403
    %v405 = vpop.permute.xlu0 %404
    %s407 = sor.u32 256, 16
    %408 = vbcast.lane.b32.xlu0 %v398, %s407
    %v409 = vpop.permute.xlu0 %408
    %s411 = sor.u32 256, 24
    %412 = vbcast.lane.b32.xlu0 %v398, %s411
    %v413 = vpop.permute.xlu0 %412
    %s415 = sor.u32 256, 32
    %416 = vbcast.lane.b32.xlu0 %v398, %s415
    %v417 = vpop.permute.xlu0 %416
    %s419 = sor.u32 256, 40
    %420 = vbcast.lane.b32.xlu0 %v398, %s419
    %v421 = vpop.permute.xlu0 %420
    %s423 = sor.u32 256, 48
    %424 = vbcast.lane.b32.xlu0 %v398, %s423
    %v425 = vpop.permute.xlu0 %424
    %s427 = sor.u32 256, 56
    %428 = vbcast.lane.b32.xlu0 %v398, %s427
    %v429 = vpop.permute.xlu0 %428
    %v430 = vlaneseq
    %v431 = vshrl.u32 %v430, 7
    %v432 = vsub.s32 1, %v431
    %v433 = vrot.slane %v394, %v432
    %435 = vbcast.lane.b32.xlu0 %v433, 256
    %v436 = vpop.permute.xlu0 %435
    %s438 = sor.u32 256, 8
    %439 = vbcast.lane.b32.xlu0 %v433, %s438
    %v440 = vpop.permute.xlu0 %439
    %s442 = sor.u32 256, 16
    %443 = vbcast.lane.b32.xlu0 %v433, %s442
    %v444 = vpop.permute.xlu0 %443
    %s446 = sor.u32 256, 24
    %447 = vbcast.lane.b32.xlu0 %v433, %s446
    %v448 = vpop.permute.xlu0 %447
    %s450 = sor.u32 256, 32
    %451 = vbcast.lane.b32.xlu0 %v433, %s450
    %v452 = vpop.permute.xlu0 %451
    %s454 = sor.u32 256, 40
    %455 = vbcast.lane.b32.xlu0 %v433, %s454
    %v456 = vpop.permute.xlu0 %455
    %s458 = sor.u32 256, 48
    %459 = vbcast.lane.b32.xlu0 %v433, %s458
    %v460 = vpop.permute.xlu0 %459
    %s462 = sor.u32 256, 56
    %463 = vbcast.lane.b32.xlu0 %v433, %s462
    %v464 = vpop.permute.xlu0 %463
    %v465 = vmul.f32 %v33, %v401
    %v466 = vmul.f32 %v34, %v405
    %v467 = vmul.f32 %v35, %v409
    %v468 = vmul.f32 %v36, %v413
    %v469 = vmul.f32 %v37, %v417
    %v470 = vmul.f32 %v38, %v421
    %v471 = vmul.f32 %v39, %v425
    %v472 = vmul.f32 %v40, %v429
    %v473 = vmul.f32 %v41, %v436
    %v474 = vmul.f32 %v42, %v440
    %v475 = vmul.f32 %v43, %v444
    %v476 = vmul.f32 %v44, %v448
    %v477 = vmul.f32 %v45, %v452
    %v478 = vmul.f32 %v46, %v456
    %v479 = vmul.f32 %v47, %v460
    %v480 = vmul.f32 %v48, %v464
    %481 = vst.msk [vmem:[#allocation6] sm:$0xff] %vm49, %v465
    %482 = vst.msk [vmem:[#allocation6 + $0x8] sm:$0xff] %vm49, %v466
    %483 = vst.msk [vmem:[#allocation6 + $0x10] sm:$0xff] %vm49, %v467
    %484 = vst.msk [vmem:[#allocation6 + $0x18] sm:$0xff] %vm49, %v468
    %485 = vst.msk [vmem:[#allocation6 + $0x20] sm:$0xff] %vm49, %v469
    %486 = vst.msk [vmem:[#allocation6 + $0x28] sm:$0xff] %vm49, %v470
    %487 = vst.msk [vmem:[#allocation6 + $0x30] sm:$0xff] %vm49, %v471
    %488 = vst.msk [vmem:[#allocation6 + $0x38] sm:$0xff] %vm49, %v472
    %489 = vst.msk [vmem:[#allocation6 + $0x40] sm:$0xff] %vm49, %v473
    %490 = vst.msk [vmem:[#allocation6 + $0x48] sm:$0xff] %vm49, %v474
    %491 = vst.msk [vmem:[#allocation6 + $0x50] sm:$0xff] %vm49, %v475
    %492 = vst.msk [vmem:[#allocation6 + $0x58] sm:$0xff] %vm49, %v476
    %493 = vst.msk [vmem:[#allocation6 + $0x60] sm:$0xff] %vm49, %v477
    %494 = vst.msk [vmem:[#allocation6 + $0x68] sm:$0xff] %vm49, %v478
    %495 = vst.msk [vmem:[#allocation6 + $0x70] sm:$0xff] %vm49, %v479
    %496 = vst.msk [vmem:[#allocation6 + $0x78] sm:$0xff] %vm49, %v480
    // Predicated region
    $region22: #{tpu_custom_call.1} parent=1 // pred_check
      _
    $region23: #{tpu_custom_call.1} parent=1 // pred_check_branch
      %498 = sbr.rel (0) target = $region25
    $region24: #{tpu_custom_call.1} parent=1 // pred_region
      %s500 = ssub.s32 2048, 2048
      %501 = vsyncadd [#allocation5], %s500
      %s502 = sshll.u32 [#allocation6], 4
      %s503 = int_to_ptr.vmem [resolvable:$true] %s502
      %508 = dma.vmem_to_hbm [thread:$0]  %s503, 2048, %s4, [#allocation5], 128, 128, 8
    $region25: #{tpu_custom_call.1} parent=1 // pred_fallthru
      _
    // Predicated region
    $region26: #{tpu_custom_call.1} parent=1 // pred_check
      _
    $region27: #{tpu_custom_call.1} parent=1 // pred_check_branch
      %510 = sbr.rel (0) target = $region29
    $region28: #{tpu_custom_call.1} parent=1 // pred_region
      %511 = dma.done [#allocation5], 2048
    $region29: #{tpu_custom_call.1} parent=1 // pred_fallthru
      _
    %512 = vsyncpa [#allocation4], 1
    %513 = vsyncpa [#allocation5], 1

</llo_original>
